<compile_context>
chip_gen: v7x
topology: tpu7x:2x2x1
jax: 0.10.0
libtpu: 0.0.40
codegen_flags: <defaults>
</compile_context>

<pallas_src>
import functools

import jax
import jax.numpy as jnp
from jax.experimental import pallas as pl
from jax.experimental.pallas import tpu as pltpu

EPS = 1e-6


# ---------------------------------------------------------------------------
# VMEM budgets (generation-aware)
# ---------------------------------------------------------------------------
def _vmem_budgets():
    """vmem_limit_bytes + slab/tile budgets from the actual chip's VMEM size."""
    vmem_cap = 64 * 1024 * 1024          # conservative default (v7x: 64 MiB/TC)
    try:
        info = pltpu.get_tpu_info()
        cap = getattr(info, "vmem_capacity_bytes", None)
        if cap:
            vmem_cap = int(cap)
    except Exception:
        pass
    vmem_limit = min((vmem_cap * 3) // 4, 100 * 1024 * 1024)
    # Fused path holds 2x double-buffered input slabs + 2x output slabs plus
    # f32 elementwise temps -> keep the raw slab at <= vmem_limit / 8.
    fused_budget = vmem_limit // 8
    # Two-pass x tile: 2x in + 2x out + temps; >8 MiB buys nothing (per-step
    # fixed overhead is already <10% of the tile DMA time at 8 MiB on v7x HBM).
    tile_budget = min(vmem_limit // 8, 8 * 1024 * 1024)
    return vmem_limit, fused_budget, tile_budget


# ---------------------------------------------------------------------------
# Kernels
# ---------------------------------------------------------------------------
def _grn_fused_kernel(gamma_ref, beta_ref, x_ref, o_ref):
    """Single-pass GRN: whole (C, T) slab of one batch element in VMEM."""
    xr = x_ref[0].astype(jnp.float32)                         # (C, T) for the reduce
    gx = jnp.sqrt(jnp.sum(xr * xr, axis=1, keepdims=True))    # (C, 1) L2 over time
    mean_gx = jnp.mean(gx, axis=0, keepdims=True)             # (1, 1) mean over C
    nx = gx * pl.reciprocal(mean_gx + EPS, approx=False)      # (C, 1)
    scale = gamma_ref[0] * nx + 1.0                           # (C, 1)
    # Re-index x for the apply so the reduce temp need not stay live;
    # y = x*(gamma*nx+1) + beta  ==  gamma*(x*nx) + beta + x.
    o_ref[0] = (x_ref[0].astype(jnp.float32) * scale + beta_ref[0]).astype(o_ref.dtype)


def _grn_scale_kernel(gamma_ref, x_ref, scale_ref, *, t_total, ragged):
    """Pass 1: accumulate sum_t x^2 per (n, c); finalize scale = gamma*nx + 1."""
    t = pl.program_id(1)

    @pl.when(t == 0)
    def _():
        scale_ref[...] = jnp.zeros_like(scale_ref)

    x = x_ref[0].astype(jnp.float32)                           # (C, tT)
    if ragged:
        # Last tile extends past T: zero-mask the padded lanes before reducing.
        off = jax.lax.broadcasted_iota(jnp.int32, x.shape, 1) + t * x.shape[1]
        x = jnp.where(off < t_total, x, 0.0)
    scale_ref[0] += jnp.sum(x * x, axis=1, keepdims=True)      # (C, 1) f32 ssq

    @pl.when(t == pl.num_programs(1) - 1)
    def _():
        gx = jnp.sqrt(scale_ref[0])                            # (C, 1)
        mean_gx = jnp.mean(gx, axis=0, keepdims=True)          # (1, 1)
        nx = gx * pl.reciprocal(mean_gx + EPS, approx=False)   # (C, 1)
        scale_ref[0] = gamma_ref[0] * nx + 1.0                 # ssq -> final scale


def _grn_apply_kernel(scale_ref, beta_ref, x_ref, o_ref):
    """Pass 2: pure multiply-add on one lane-dense (C, tT) tile."""
    o_ref[0] = (x_ref[0].astype(jnp.float32) * scale_ref[0]
                + beta_ref[0]).astype(o_ref.dtype)


# ---------------------------------------------------------------------------
# Wrapper
# ---------------------------------------------------------------------------
def _choose_time_tile(C, T, itemsize, budget):
    """Largest lane-aligned (multiple-of-128) T tile within `budget` bytes."""
    if T <= 128:
        return T                                   # full axis (block == array dim)
    tT = (budget // (C * itemsize)) // 128 * 128
    return max(128, min(tT, (T // 128) * 128))


@functools.partial(jax.jit,
                   static_argnames=("force_two_pass", "time_tile_budget_bytes"))
def global_response_norm_1d(x, gamma, beta, *, force_two_pass=False,
                            time_tile_budget_bytes=None):
    """GlobalResponseNorm1d forward. x: (N, C, T); gamma/beta: (1, C, 1) or (C,)."""
    N, C, T = x.shape
    gamma = jnp.asarray(gamma, jnp.float32).reshape(1, C, 1)
    beta = jnp.asarray(beta, jnp.float32).reshape(1, C, 1)
    itemsize = jnp.dtype(x.dtype).itemsize
    slab_bytes = C * T * itemsize

    vmem_limit, fused_budget, tile_budget = _vmem_budgets()
    if time_tile_budget_bytes is not None:
        tile_budget = int(time_tile_budget_bytes)

    single_pass = (not force_two_pass) and slab_bytes <= fused_budget
    if single_pass and N == 1 and slab_bytes > tile_budget:
        # A 1-step fused grid has no DMA/compute overlap and leaves the second
        # v7x TensorCore idle; the tiled path pipelines its T-tile axis.
        single_pass = False

    if single_pass:
        # Fused path: 1 HBM read + 1 HBM write of x, pipelined across N.
        return pl.pallas_call(
            _grn_fused_kernel,
            out_shape=jax.ShapeDtypeStruct((N, C, T), x.dtype),
            grid_spec=pltpu.PrefetchScalarGridSpec(
                num_scalar_prefetch=0,
                grid=(N,),
                in_specs=[
                    pl.BlockSpec((1, C, 1), lambda n: (0, 0, 0)),   # gamma
                    pl.BlockSpec((1, C, 1), lambda n: (0, 0, 0)),   # beta
                    pl.BlockSpec((1, C, T), lambda n: (n, 0, 0)),   # x
                ],
                out_specs=pl.BlockSpec((1, C, T), lambda n: (n, 0, 0)),
            ),
            compiler_params=pltpu.CompilerParams(
                dimension_semantics=("parallel",),
                vmem_limit_bytes=vmem_limit),
        )(gamma, beta, x)

    # ------------------------------------------------------------------
    # Two-pass tiled path (bounded VMEM for arbitrarily large T).
    # ------------------------------------------------------------------
    tT = _choose_time_tile(C, T, itemsize, tile_budget)
    nT = pl.cdiv(T, tT)
    ragged = (T % tT) != 0

    # Pass 1: scale[n, c, 0] = gamma[c] * nx[n, c] + 1; f32 accumulation of
    # sum_t x^2 across the "arbitrary" T-tile axis, finalized on the last tile.
    # TODO(synk): for N==1 on v7x, split the T reduction into 2 'parallel'
    # partials so both TensorCores share this read-dominated pass.
    scale = pl.pallas_call(
        functools.partial(_grn_scale_kernel, t_total=T, ragged=ragged),
        out_shape=jax.ShapeDtypeStruct((N, C, 1), jnp.float32),
        grid_spec=pltpu.PrefetchScalarGridSpec(
            num_scalar_prefetch=0,
            grid=(N, nT),
            in_specs=[
                pl.BlockSpec((1, C, 1), lambda n, t: (0, 0, 0)),    # gamma
                pl.BlockSpec((1, C, tT), lambda n, t: (n, 0, t)),   # x
            ],
            out_specs=pl.BlockSpec((1, C, 1), lambda n, t: (n, 0, 0)),
        ),
        compiler_params=pltpu.CompilerParams(
            dimension_semantics=("parallel", "arbitrary"),
            vmem_limit_bytes=vmem_limit),
    )(gamma, x)

    # Pass 2: y = x * scale + beta per lane-dense (C, tT) tile; both grid axes
    # are independent ("parallel", "parallel") for megacore.
    return pl.pallas_call(
        _grn_apply_kernel,
        out_shape=jax.ShapeDtypeStruct((N, C, T), x.dtype),
        grid_spec=pltpu.PrefetchScalarGridSpec(
            num_scalar_prefetch=0,
            grid=(N, nT),
            in_specs=[
                pl.BlockSpec((1, C, 1), lambda n, t: (n, 0, 0)),    # scale
                pl.BlockSpec((1, C, 1), lambda n, t: (0, 0, 0)),    # beta
                pl.BlockSpec((1, C, tT), lambda n, t: (n, 0, t)),   # x
            ],
            out_specs=pl.BlockSpec((1, C, tT), lambda n, t: (n, 0, t)),
        ),
        compiler_params=pltpu.CompilerParams(
            dimension_semantics=("parallel", "parallel"),
            vmem_limit_bytes=vmem_limit),
    )(scale, beta, x)


# ---------------------------------------------------------------------------
# Pure-JAX reference (matches the PyTorch forward)
# ---------------------------------------------------------------------------
def reference_grn1d(x, gamma, beta, eps=EPS):
    C = x.shape[1]
    gamma = jnp.asarray(gamma, jnp.float32).reshape(1, C, 1)
    beta = jnp.asarray(beta, jnp.float32).reshape(1, C, 1)
    xf = x.astype(jnp.float32)
    gx = jnp.sqrt(jnp.sum(xf * xf, axis=2, keepdims=True))     # torch.norm(p=2, dim=2)
    nx = gx / (jnp.mean(gx, axis=1, keepdims=True) + eps)
    return (gamma * (xf * nx) + beta + xf).astype(x.dtype)


if __name__ == "__main__":
    key = jax.random.PRNGKey(0)

    # --- Small canonical shape: fused path + forced two-pass path. ---------
    N, C, T = 2, 4, 16
    kx, kg, kb, kx2 = jax.random.split(key, 4)
    x = jax.random.normal(kx, (N, C, T), dtype=jnp.float32)
    # The module zero-initializes gamma/beta; use small random values so the
    # normalization path is actually exercised (deterministic, synthetic).
    gamma = jax.random.normal(kg, (1, C, 1), dtype=jnp.float32) * 0.5
    beta = jax.random.normal(kb, (1, C, 1), dtype=jnp.float32) * 0.5
    ref = reference_grn1d(x, gamma, beta)

    out_fused = jax.block_until_ready(global_response_norm_1d(x, gamma, beta))
    out_tiled = jax.block_until_ready(
        global_response_norm_1d(x, gamma, beta, force_two_pass=True))

    assert out_fused.shape == (N, C, T), out_fused.shape
    assert out_tiled.shape == (N, C, T), out_tiled.shape
    assert jnp.allclose(out_fused, ref, atol=1e-5, rtol=1e-5), (
        float(jnp.max(jnp.abs(out_fused - ref))))
    assert jnp.allclose(out_tiled, ref, atol=1e-5, rtol=1e-5), (
        float(jnp.max(jnp.abs(out_tiled - ref))))

    # --- Ragged-T two-pass path: T=200 -> tT=128, masked last tile. --------
    N2, C2, T2 = 2, 8, 200
    x2 = jax.random.normal(kx2, (N2, C2, T2), dtype=jnp.float32)
    gamma2 = jnp.full((1, C2, 1), 0.3, dtype=jnp.float32)
    beta2 = jnp.full((1, C2, 1), -0.1, dtype=jnp.float32)
    ref2 = reference_grn1d(x2, gamma2, beta2)
    out_ragged = jax.block_until_ready(
        global_response_norm_1d(x2, gamma2, beta2, force_two_pass=True,
                                time_tile_budget_bytes=4096))
    assert out_ragged.shape == (N2, C2, T2), out_ragged.shape
    assert jnp.allclose(out_ragged, ref2, atol=1e-5, rtol=1e-5), (
        float(jnp.max(jnp.abs(out_ragged - ref2))))

    print("KERNEL_OK")
</pallas_src>

<mosaic_0001>
module attributes {stable_mosaic.version = 11 : i64} {
  func.func @_grn_fused_kernel(%arg0: i32, %arg1: memref<1x4x1xf32, #tpu.memory_space<vmem>>, %arg2: memref<1x4x1xf32, #tpu.memory_space<vmem>>, %arg3: memref<1x4x16xf32, #tpu.memory_space<vmem>>, %arg4: memref<1x4x16xf32, #tpu.memory_space<vmem>>) attributes {dimension_semantics = [#tpu.dimension_semantics<parallel>], iteration_bounds = array<i64: 2>, scalar_prefetch = 0 : i64, scratch_operands = 0 : i64, tpu.core_type = #tpu.core_type<tc>, window_params = [{pipeline_mode = #tpu.pipeline_mode<synchronous>, transform_indices = @transform_0, window_bounds = array<i64: 1, 4, 1>}, {pipeline_mode = #tpu.pipeline_mode<synchronous>, transform_indices = @transform_1, window_bounds = array<i64: 1, 4, 1>}, {transform_indices = @transform_2, window_bounds = array<i64: 1, 4, 16>}, {transform_indices = @transform_3, window_bounds = array<i64: 1, 4, 16>}]} {
    %c0 = arith.constant 0 : index
    %c0_0 = arith.constant 0 : index
    %c0_1 = arith.constant 0 : index
    %0 = vector.load %arg3[%c0, %c0_0, %c0_1] : memref<1x4x16xf32, #tpu.memory_space<vmem>>, vector<1x4x16xf32>
    %1 = vector.shape_cast %0 : vector<1x4x16xf32> to vector<4x16xf32>
    %2 = arith.mulf %1, %1 : vector<4x16xf32>
    %cst = arith.constant dense<0.000000e+00> : vector<4xf32>
    %3 = vector.multi_reduction <add>, %2, %cst [1] : vector<4x16xf32> to vector<4xf32>
    %4 = vector.shape_cast %3 : vector<4xf32> to vector<4x1xf32>
    %5 = math.sqrt %4 : vector<4x1xf32>
    %cst_2 = arith.constant dense<0.000000e+00> : vector<1xf32>
    %6 = vector.multi_reduction <add>, %5, %cst_2 [0] : vector<4x1xf32> to vector<1xf32>
    %7 = vector.shape_cast %6 : vector<1xf32> to vector<1x1xf32>
    %cst_3 = arith.constant 4.000000e+00 : f32
    %8 = vector.broadcast %cst_3 : f32 to vector<1x1xf32>
    %9 = arith.divf %7, %8 : vector<1x1xf32>
    %cst_4 = arith.constant 9.99999997E-7 : f32
    %10 = vector.broadcast %cst_4 : f32 to vector<1x1xf32>
    %11 = arith.addf %9, %10 : vector<1x1xf32>
    %12 = tpu.reciprocal %11 : vector<1x1xf32> -> vector<1x1xf32>
    %13 = vector.broadcast %12 : vector<1x1xf32> to vector<4x1xf32>
    %14 = arith.mulf %5, %13 : vector<4x1xf32>
    %c0_5 = arith.constant 0 : index
    %c0_6 = arith.constant 0 : index
    %c0_7 = arith.constant 0 : index
    %15 = vector.load %arg1[%c0_5, %c0_6, %c0_7] : memref<1x4x1xf32, #tpu.memory_space<vmem>>, vector<1x4x1xf32>
    %16 = vector.shape_cast %15 : vector<1x4x1xf32> to vector<4x1xf32>
    %17 = arith.mulf %16, %14 : vector<4x1xf32>
    %cst_8 = arith.constant 1.000000e+00 : f32
    %18 = vector.broadcast %cst_8 : f32 to vector<4x1xf32>
    %19 = arith.addf %17, %18 : vector<4x1xf32>
    %c0_9 = arith.constant 0 : index
    %c0_10 = arith.constant 0 : index
    %c0_11 = arith.constant 0 : index
    %20 = vector.load %arg3[%c0_9, %c0_10, %c0_11] : memref<1x4x16xf32, #tpu.memory_space<vmem>>, vector<1x4x16xf32>
    %21 = vector.shape_cast %20 : vector<1x4x16xf32> to vector<4x16xf32>
    %22 = vector.broadcast %19 : vector<4x1xf32> to vector<4x16xf32>
    %23 = arith.mulf %21, %22 : vector<4x16xf32>
    %c0_12 = arith.constant 0 : index
    %c0_13 = arith.constant 0 : index
    %c0_14 = arith.constant 0 : index
    %24 = vector.load %arg2[%c0_12, %c0_13, %c0_14] : memref<1x4x1xf32, #tpu.memory_space<vmem>>, vector<1x4x1xf32>
    %25 = vector.shape_cast %24 : vector<1x4x1xf32> to vector<4x1xf32>
    %26 = vector.broadcast %25 : vector<4x1xf32> to vector<4x16xf32>
    %27 = arith.addf %23, %26 : vector<4x16xf32>
    %c0_15 = arith.constant 0 : index
    %c0_16 = arith.constant 0 : index
    %c0_17 = arith.constant 0 : index
    %28 = vector.load %arg4[%c0_15, %c0_16, %c0_17] : memref<1x4x16xf32, #tpu.memory_space<vmem>>, vector<1x4x16xf32>
    %29 = vector.shape_cast %28 : vector<1x4x16xf32> to vector<4x16xf32>
    %30 = vector.shape_cast %27 : vector<4x16xf32> to vector<1x4x16xf32>
    tpu.vector_store %arg4[%c0_15, %c0_16, %c0_17], %30 {strides = array<i32>} : memref<1x4x16xf32, #tpu.memory_space<vmem>>, vector<1x4x16xf32>,
    return
  }
  func.func @transform_0(%arg0: i32) -> (i32, i32, i32) {
    %c0_i32 = arith.constant 0 : i32
    %c0_i32_0 = arith.constant 0 : i32
    %c0_i32_1 = arith.constant 0 : i32
    %c0_i32_2 = arith.constant 0 : i32
    return %c0_i32, %c0_i32_0, %c0_i32_1 : i32, i32, i32
  }
  func.func @transform_1(%arg0: i32) -> (i32, i32, i32) {
    %c0_i32 = arith.constant 0 : i32
    %c0_i32_0 = arith.constant 0 : i32
    %c0_i32_1 = arith.constant 0 : i32
    %c0_i32_2 = arith.constant 0 : i32
    return %c0_i32, %c0_i32_0, %c0_i32_1 : i32, i32, i32
  }
  func.func @transform_2(%arg0: i32) -> (i32, i32, i32) {
    %c0_i32 = arith.constant 0 : i32
    %c0_i32_0 = arith.constant 0 : i32
    %c0_i32_1 = arith.constant 0 : i32
    return %arg0, %c0_i32, %c0_i32_0 : i32, i32, i32
  }
  func.func @transform_3(%arg0: i32) -> (i32, i32, i32) {
    %c0_i32 = arith.constant 0 : i32
    %c0_i32_0 = arith.constant 0 : i32
    %c0_i32_1 = arith.constant 0 : i32
    return %arg0, %c0_i32, %c0_i32_0 : i32, i32, i32
  }
}

</mosaic_0001>

<llo_original>
// kernel: global_response_norm_1d.1
$region0: #{global_response_norm_1d.1}
  #allocation0 [shape = 'u32[]', space=smem, size = 0x4, offset = 0x4, fixed_abs, tag = 'smem constant byte address 0x4 - core index']
  #allocation1 [shape = 'u32[144,128]{1,0:T(1,128)}', space=vmem, size = 0x12000, scoped, tag = 'internal scratch']
  %s0 = inlined_call_operand.vmem [shape: f32[1,4,1], index: 0, kind: input, shape index: {}]
  %s1 = inlined_call_operand.vmem [shape: f32[1,4,1], index: 1, kind: input, shape index: {}]
  %s2 = inlined_call_operand.vmem [shape: f32[2,4,16], index: 2, kind: input, shape index: {}]
  %s3 = inlined_call_operand.hbm [shape: f32[2,4,16], index: 3, kind: output, shape index: {}]
  %s4 = sld [smem:[#allocation0]]
  $region45: #{global_response_norm_1d.1} parent=0
    _
  %s6 = ssub.s32 1, %s4
  %s7 = scalar_select 0, %s6, %s4
  $region1: #{global_response_norm_1d.1} parent=0
    #allocation2 [shape = 'u8[4096]{0}', space=vmem, size = 0x1000, scoped, tag = 'output window, operand 0']
    #allocation3 [shape = 's32[2]{0}', space=sflag, size = 0x8, scoped, tag = 'scoped memory for global_response_norm_1d.1']
    %8 = vsyncpa [#allocation3], 0
    %s9 = scalar_lea.sflag [#allocation3], 1
    %10 = vsyncpa %s9, 0
    loop: start=0, step=1, limit=4
    $region2: #{global_response_norm_1d.1} parent=1 // loop_pre_header
      _
    $region3: #{global_response_norm_1d.1} parent=1 // loop_header
      %s12 = sphi 0, %s16
      %p13 = scmp.ge.s32.totalorder %s12, 4
      %s20 = sphi 0, %s20
      %s22 = sphi 0, %s20
      %s23 = sphi 0, %s22
      %s37 = sphi 0, %s23
      %s41 = sphi 0, %s41
      %s43 = sphi 0, %s41
      %s44 = sphi 0, %s43
      %s58 = sphi 0, %s44
      %s64 = sphi 0, %s66
      %s67 = sphi 0, %s64
      %s68 = sphi 0, %s67
      %s84 = sphi 0, %s68
      %s90 = sphi 0, %s92
      %s93 = sphi 0, %s90
      %s94 = sphi 0, %s93
      %s110 = sphi 0, %s94
    $region4: #{global_response_norm_1d.1} parent=1 // loop_header_branch
      %15 = sbr.rel (%p13) target = $region8
    $region5: #{global_response_norm_1d.1} parent=1 // loop_body
      %s17 = ssub.s32 %s12, 1
      %s18 = ssub.s32 %s12, 2
      %s19 = sadd.s32 %s12, 1
      %s21 = sadd.s32 %s20, 1
      %p24 = scmp.eq.s32.totalorder %s12, 1
      %p25 = scmp.ne.s32.totalorder %s20, %s22
      %p26 = scmp.eq.s32.totalorder %s12, 0
      %p27 = por %p25, %p26
      %p28 = scmp.ne.s32.totalorder %s20, %s22
      %p29 = scmp.eq.s32.totalorder %s17, 1
      %p30 = por %p28, %p29
      %p31 = scmp.ne.s32.totalorder %s22, %s23
      %p32 = scmp.eq.s32.totalorder %s17, 0
      %p33 = por %p31, %p32
      %p34 = scmp.ne.s32.totalorder %s22, %s23
      %p35 = scmp.eq.s32.totalorder %s18, 1
      %p36 = por %p34, %p35
      %p38 = scmp.ne.s32.totalorder %s23, %s37
      %p39 = scmp.eq.s32.totalorder %s18, 0
      %p40 = por %p38, %p39
      %s42 = sadd.s32 %s41, 1
      %p45 = scmp.eq.s32.totalorder %s12, 1
      %p46 = scmp.ne.s32.totalorder %s41, %s43
      %p47 = scmp.eq.s32.totalorder %s12, 0
      %p48 = por %p46, %p47
      %p49 = scmp.ne.s32.totalorder %s41, %s43
      %p50 = scmp.eq.s32.totalorder %s17, 1
      %p51 = por %p49, %p50
      %p52 = scmp.ne.s32.totalorder %s43, %s44
      %p53 = scmp.eq.s32.totalorder %s17, 0
      %p54 = por %p52, %p53
      %p55 = scmp.ne.s32.totalorder %s43, %s44
      %p56 = scmp.eq.s32.totalorder %s18, 1
      %p57 = por %p55, %p56
      %p59 = scmp.ne.s32.totalorder %s44, %s58
      %p60 = scmp.eq.s32.totalorder %s18, 0
      %p61 = por %p59, %p60
      %s62 = ssub.s32 %s12, %s19
      %p63 = scmp.eq.s32.totalorder %s62, 0
      %s65 = sadd.s32 %s64, 1
      %s66 = scalar_select %p63, %s64, %s65
      %p69 = pneg %p63
      %p70 = scmp.eq.s32.totalorder %s12, 1
      %p71 = por %p69, %p70
      %p72 = scmp.ne.s32.totalorder %s64, %s67
      %p73 = scmp.eq.s32.totalorder %s12, 0
      %p74 = por %p72, %p73
      %p75 = scmp.ne.s32.totalorder %s64, %s67
      %p76 = scmp.eq.s32.totalorder %s17, 1
      %p77 = por %p75, %p76
      %p78 = scmp.ne.s32.totalorder %s67, %s68
      %p79 = scmp.eq.s32.totalorder %s17, 0
      %p80 = por %p78, %p79
      %p81 = scmp.ne.s32.totalorder %s67, %s68
      %p82 = scmp.eq.s32.totalorder %s18, 1
      %p83 = por %p81, %p82
      %p85 = scmp.ne.s32.totalorder %s68, %s84
      %p86 = scmp.eq.s32.totalorder %s18, 0
      %p87 = por %p85, %p86
      %s88 = ssub.s32 %s12, %s19
      %p89 = scmp.eq.s32.totalorder %s88, 0
      %s91 = sadd.s32 %s90, 1
      %s92 = scalar_select %p89, %s90, %s91
      %p95 = pneg %p89
      %p96 = scmp.eq.s32.totalorder %s12, 1
      %p97 = por %p95, %p96
      %p98 = scmp.ne.s32.totalorder %s90, %s93
      %p99 = scmp.eq.s32.totalorder %s12, 0
      %p100 = por %p98, %p99
      %p101 = scmp.ne.s32.totalorder %s90, %s93
      %p102 = scmp.eq.s32.totalorder %s17, 1
      %p103 = por %p101, %p102
      %p104 = scmp.ne.s32.totalorder %s93, %s94
      %p105 = scmp.eq.s32.totalorder %s17, 0
      %p106 = por %p104, %p105
      %p107 = scmp.ne.s32.totalorder %s93, %s94
      %p108 = scmp.eq.s32.totalorder %s18, 1
      %p109 = por %p107, %p108
      %p111 = scmp.ne.s32.totalorder %s94, %s110
      %p112 = scmp.eq.s32.totalorder %s18, 0
      %p113 = por %p111, %p112
      %p114 = scmp.le.s32.totalorder 1, %s12
      %p115 = scmp.lt.s32.totalorder %s12, 3
      %p116 = pnand %p114, %p115
      %p117 = pneg %p116
      // Predicated region
      $region9: #{global_response_norm_1d.1} parent=5 // pred_check
        _
      $region10: #{global_response_norm_1d.1} parent=5 // pred_check_branch
        %119 = sbr.rel (%p116) target = $region12
      $region11: #{global_response_norm_1d.1} parent=5 // pred_region
        %s120 = ssub.s32 %s12, 1
        // Predicated region
        $region13: #{global_response_norm_1d.1} parent=11 // pred_check
          %p121 = pneg %p33
        $region14: #{global_response_norm_1d.1} parent=11 // pred_check_branch
          %123 = sbr.rel (%p121) target = $region16
        $region15: #{global_response_norm_1d.1} parent=11 // pred_region
          _
        $region16: #{global_response_norm_1d.1} parent=11 // pred_fallthru
          _
        // Predicated region
        $region17: #{global_response_norm_1d.1} parent=11 // pred_check
          %p124 = pneg %p54
        $region18: #{global_response_norm_1d.1} parent=11 // pred_check_branch
          %126 = sbr.rel (%p124) target = $region20
        $region19: #{global_response_norm_1d.1} parent=11 // pred_region
          _
        $region20: #{global_response_norm_1d.1} parent=11 // pred_fallthru
          _
      $region12: #{global_response_norm_1d.1} parent=5 // pred_fallthru
        _
      %p127 = scmp.lt.s32.totalorder %s12, 2
      // Predicated region
      $region21: #{global_response_norm_1d.1} parent=5 // pred_check
        %p128 = pneg %p127
      $region22: #{global_response_norm_1d.1} parent=5 // pred_check_branch
        %130 = sbr.rel (%p128) target = $region24
      $region23: #{global_response_norm_1d.1} parent=5 // pred_region
        // Predicated region
        $region25: #{global_response_norm_1d.1} parent=23 // pred_check
          %p131 = pneg %p74
        $region26: #{global_response_norm_1d.1} parent=23 // pred_check_branch
          %133 = sbr.rel (%p131) target = $region28
        $region27: #{global_response_norm_1d.1} parent=23 // pred_region
          %p134 = scmp.lt.s32.totalorder %s12, 1
          %s135 = scalar_select %p134, %s12, 1
          %s136 = smul.addr %s135, 4
          %s137 = scalar_lea.vmem %s2, %s136
        $region28: #{global_response_norm_1d.1} parent=23 // pred_fallthru
          _
      $region24: #{global_response_norm_1d.1} parent=5 // pred_fallthru
        _
      %p138 = scmp.le.s32.totalorder 1, %s12
      %p139 = scmp.lt.s32.totalorder %s12, 3
      %p140 = pnand %p138, %p139
      %p141 = pneg %p140
      // Predicated region
      $region29: #{global_response_norm_1d.1} parent=5 // pred_check
        _
      $region30: #{global_response_norm_1d.1} parent=5 // pred_check_branch
        %143 = sbr.rel (%p140) target = $region32
      $region31: #{global_response_norm_1d.1} parent=5 // pred_region
        %s144 = ssub.s32 %s12, 1
        %p145 = pneg %p33
        %p146 = pneg %p30
        %p147 = pneg %p54
        %p148 = pneg %p51
        %p149 = scmp.lt.s32.totalorder %s17, 1
        %s150 = scalar_select %p149, %s17, 1
        %s151 = smul.addr %s150, 4
        %s152 = scalar_lea.vmem %s2, %s151
        %p153 = pneg %p80
        %p154 = pneg %p77
        %p155 = pneg %p106
        %p156 = pneg %p103
        %s157 = sand.u32 %s93, 1
        %s158 = scalar_lea.sflag [#allocation3], %s157
        %s159 = sand.u32 %s93, 1
        %s160 = smul.addr %s159, 4
        %s161 = scalar_lea.vmem [#allocation2], %s160
        %p162 = scmp.lt.s32.totalorder %s17, 1
        %s163 = scalar_select %p162, %s17, 1
        %s164 = smul.addr %s163, 4
        %s165 = scalar_lea.vmem %s2, %s164
        %v166 = vld [vmem:[%s165] sm:$0xf]
        %v167 = vmul.f32 %v166, %v166
        %vm168 = vcmask 125952
        %v169 = vsel %vm168, %v167, 0.0
        %170 = vadd.xlane.f32.xlu0 %v169
        %v171 = vpop.xlane.xlu0 %170
        %v172 = vrsqrt.pop %v171
        %v173 = vmul.f32 %v171, %v172
        %vm174 = vcmp.eq.f32.partialorder %v171, inf
        %v175 = vsel %vm174, %v171, %v173
        %vm176 = vcmp.eq.f32.partialorder %v171, 0.0
        %v177 = vand.u32 %v171, 2147483648
        %v178 = vsel %vm176, %v177, %v175
        %vm179 = vcmask 1043456
        %v180 = vsel %vm179, %v178, 0.0
        %v181 = vrot.slane %v180, 4
        %v182 = vadd.f32 %v180, %v181
        %v183 = vrot.slane %v182, 2
        %v184 = vadd.f32 %v182, %v183
        %v185 = vrot.slane %v184, 1
        %v186 = vadd.f32 %v184, %v185
        %v187 = vrcp.pop 4.0
        %v188 = vmul.f32 %v186, %v187
        %v189 = vadd.f32 %v188, 1e-06
        %v190 = vrcp.pop %v189
        %v191 = vmul.f32 %v178, %v190
        %v192 = vld [vmem:[%s0] sm:$0xf]
        %v193 = vmul.f32 %v192, %v191
        %v194 = vadd.f32 %v193, 1.0
        %196 = vset.pattern.permute.xlu0 0
        %197 = vperm.xlu0 %196, %v194
        %v198 = vpop.permute.xlu0 %197
        %v200 = vmul.f32 %v166, %v198
        %v201 = vld [vmem:[%s1] sm:$0xf]
        %203 = vset.pattern.permute.xlu0 0
        %204 = vperm.xlu0 %203, %v201
        %v205 = vpop.permute.xlu0 %204
        %v207 = vadd.f32 %v200, %v205
        %208 = vst.msk [vmem:[%s161] sm:$0xf] %vm168, %v207
        %s209 = sand.u32 %s93, 1
        %s210 = scalar_lea.sflag [#allocation3], %s209
        %s211 = sand.u32 %s93, 1
        %s212 = smul.addr %s211, 4
        %s213 = scalar_lea.vmem [#allocation2], %s212
        // Predicated region
        $region33: #{global_response_norm_1d.1} parent=31 // pred_check
          %p214 = pneg %p103
        $region34: #{global_response_norm_1d.1} parent=31 // pred_check_branch
          %216 = sbr.rel (%p214) target = $region36
        $region35: #{global_response_norm_1d.1} parent=31 // pred_region
          %s218 = ssub.s32 64, 64
          %219 = vsyncadd %s210, %s218
          %s220 = smul.addr %s17, 64
          %s221 = scalar_lea.hbm %s3, %s220
          %s223 = sshll.u32 %s213, 4
          %s224 = int_to_ptr.vmem [resolvable:$true] %s223
          %226 = dma.vmem_to_hbm [thread:$0]  %s224, 64, %s221, %s210
        $region36: #{global_response_norm_1d.1} parent=31 // pred_fallthru
          _
      $region32: #{global_response_norm_1d.1} parent=5 // pred_fallthru
        _
      %p227 = scmp.le.s32.totalorder 2, %s12
      // Predicated region
      $region37: #{global_response_norm_1d.1} parent=5 // pred_check
        %p228 = pneg %p227
      $region38: #{global_response_norm_1d.1} parent=5 // pred_check_branch
        %230 = sbr.rel (%p228) target = $region40
      $region39: #{global_response_norm_1d.1} parent=5 // pred_region
        %s231 = ssub.s32 %s12, 2
        // Predicated region
        $region41: #{global_response_norm_1d.1} parent=39 // pred_check
          %p232 = pneg %p109
        $region42: #{global_response_norm_1d.1} parent=39 // pred_check_branch
          %234 = sbr.rel (%p232) target = $region44
        $region43: #{global_response_norm_1d.1} parent=39 // pred_region
          %s235 = sand.u32 %s94, 1
          %s236 = scalar_lea.sflag [#allocation3], %s235
          %s237 = sand.u32 %s94, 1
          %s238 = smul.addr %s237, 4
          %s239 = scalar_lea.vmem [#allocation2], %s238
          %240 = dma.done %s236, 64
        $region44: #{global_response_norm_1d.1} parent=39 // pred_fallthru
          _
      $region40: #{global_response_norm_1d.1} parent=5 // pred_fallthru
        _
    $region6: #{global_response_norm_1d.1} parent=1 // loop_footer
      %s16 = sadd.s32 1, %s12
    $region7: #{global_response_norm_1d.1} parent=1 // loop_footer_branch
      %11 = sbr.rel target = $region3
    $region8: #{global_response_norm_1d.1} parent=1 // loop_exit
      _
    %241 = vsyncpa [#allocation3], 1
    %s242 = scalar_lea.sflag [#allocation3], 1
    %243 = vsyncpa %s242, 1

</llo_original>
